<compile_context>
chip_gen: v7x
topology: tpu7x:2x2x1
jax: 0.10.0
libtpu: 0.0.40
codegen_flags: <defaults>
</compile_context>

<pallas_src>
import functools

import jax
import jax.numpy as jnp
from jax.experimental import pallas as pl
from jax.experimental.pallas import tpu as pltpu

BN_EPS = 1e-5
LANE = 128      # lane (last-dim) tile width
SUBLANE = 8     # sublane (second-to-last-dim) tile height for f32


def _round_up(x: int, m: int) -> int:
    return ((x + m - 1) // m) * m


def _rep_layer_kernel(x_ref, w0_ref, wl_ref, g_ref, b_ref, o_ref, h_ref, *,
                      n_real: int, n_layers: int):
    """One grid step == one representation layer: h <- ELU(BN_train(h @ W_l)).

    x_ref:  (Np, Din) padded input, resident (read only at step 0).
    w0_ref: (Din, D)  layer-0 weight, resident.
    wl_ref: (1, D, D) streamed weight block for layer l (l >= 1), double-buffered.
    g_ref / b_ref: (1, 1, D) per-layer BN gamma / beta blocks.
    o_ref:  (Np, D) resident output block, written at the last step only.
    h_ref:  (Np, D) VMEM scratch holding the activation across grid steps.
    """
    l = pl.program_id(0)
    inv_n = jnp.float32(1.0 / n_real)

    # ---- Linear on the MXU.  Bias dropped: exact no-op under training BN. ----
    @pl.when(l == 0)
    def _():
        h_ref[...] = jnp.dot(x_ref[...], w0_ref[...],
                             preferred_element_type=jnp.float32)

    @pl.when(l > 0)
    def _():
        h_ref[...] = jnp.dot(h_ref[...], wl_ref[0],
                             preferred_element_type=jnp.float32)

    h = h_ref[...]                                  # (Np, D); padded batch rows
                                                    # are exactly zero here.

    # ---- BatchNorm1d (training): single-pass sum / sum-of-squares over the
    # real rows (padded rows contribute exact zeros to both sums). ----
    s1 = jnp.sum(h, axis=0, keepdims=True)          # (1, D)
    s2 = jnp.sum(h * h, axis=0, keepdims=True)      # (1, D)
    mean = s1 * inv_n
    var = s2 * inv_n - mean * mean                  # biased batch variance

    # Fold BN into a single per-element FMA: h * scale + shift (rsqrt on EUP).
    scale = jax.lax.rsqrt(var + BN_EPS) * g_ref[0]  # (1, D)
    shift = b_ref[0] - mean * scale                 # (1, D)
    h_bn = h * scale + shift

    # ---- ELU(alpha=1): x if x > 0 else exp(x) - 1; exp input clamped <= 0. ----
    act = jnp.where(h_bn > 0.0, h_bn,
                    jnp.exp(jnp.minimum(h_bn, 0.0)) - 1.0)

    # Re-zero the padded batch rows (single mask multiply per layer) so the
    # next layer's matmul output and one-pass stats stay clean.
    row_ids = jax.lax.broadcasted_iota(jnp.int32, (act.shape[0], 1), 0)
    act = act * (row_ids < n_real).astype(jnp.float32)

    h_ref[...] = act

    @pl.when(l == n_layers - 1)
    def _():
        o_ref[...] = act


def _vmem_limit_bytes(n_pad: int, din_pad: int, d_pad: int) -> int:
    """Shape-derived scoped-VMEM limit, capped per TPU generation."""
    f32 = 4
    resident = (n_pad * din_pad          # x (resident)
                + din_pad * d_pad        # layer-0 weight (resident)
                + 2 * d_pad * d_pad      # streamed weight, double-buffered
                + 2 * n_pad * d_pad      # h scratch + resident output block
                + 4 * d_pad)             # gamma / beta, double-buffered
    need = resident * f32
    limit = max(2 * need, 32 * 1024 * 1024)         # 2x headroom for temporaries
    try:
        cap = int(pltpu.get_tpu_info().vmem_capacity_bytes) * 7 // 8
    except Exception:
        cap = 56 * 1024 * 1024                       # v7x-safe fallback
    # If need ever exceeds the cap, compile fails cleanly -> trigger for the
    # batch-tiled two-pass BN fallback (see TODO at top of file).
    return min(limit, cap)


@functools.partial(jax.jit, static_argnames=("n_units",))
def representation_net_forward(x, w0_pad, wl_stk, g_stk, b_stk, *, n_units):
    """x: (N, n_unit_in) float32.  Padded/stacked params from pack_*_params."""
    n, d_in = x.shape
    din_pad, d_pad = w0_pad.shape
    n_layers = g_stk.shape[0]
    n_pad = _round_up(n, SUBLANE)

    # Per-call work is just the input zero-pad (padded rows/cols exactly zero).
    x_pad = jnp.zeros((n_pad, din_pad), jnp.float32).at[:n, :d_in].set(
        x.astype(jnp.float32))

    kernel = functools.partial(_rep_layer_kernel, n_real=n, n_layers=n_layers)

    grid_spec = pltpu.PrefetchScalarGridSpec(
        num_scalar_prefetch=0,
        grid=(n_layers,),
        in_specs=[
            pl.BlockSpec((n_pad, din_pad), lambda l: (0, 0)),       # x (resident)
            pl.BlockSpec((din_pad, d_pad), lambda l: (0, 0)),       # W_0 (resident)
            # Streamed weight for layer l (unused at l==0); clamped index makes
            # step 0 and step 1 share the block, so layer-1's weight DMA
            # overlaps layer-0's matmul.
            pl.BlockSpec((1, d_pad, d_pad),
                         lambda l: (jnp.maximum(l - 1, 0), 0, 0)),
            pl.BlockSpec((1, 1, d_pad), lambda l: (l, 0, 0)),       # gamma_l
            pl.BlockSpec((1, 1, d_pad), lambda l: (l, 0, 0)),       # beta_l
        ],
        out_specs=pl.BlockSpec((n_pad, d_pad), lambda l: (0, 0)),   # resident out
        scratch_shapes=[pltpu.VMEM((n_pad, d_pad), jnp.float32)],   # persistent h
    )

    flops = (2 * n_pad * din_pad * d_pad
             + 2 * max(n_layers - 1, 0) * n_pad * d_pad * d_pad
             + 8 * n_layers * n_pad * d_pad)
    bytes_accessed = 4 * (n_pad * din_pad + din_pad * d_pad
                          + max(n_layers - 1, 1) * d_pad * d_pad
                          + 2 * n_layers * d_pad + n_pad * d_pad)
    cost = pl.CostEstimate(flops=flops,
                           transcendentals=n_layers * n_pad * d_pad,
                           bytes_accessed=bytes_accessed)

    out_pad = pl.pallas_call(
        kernel,
        out_shape=jax.ShapeDtypeStruct((n_pad, d_pad), jnp.float32),
        grid_spec=grid_spec,
        compiler_params=pltpu.CompilerParams(
            dimension_semantics=("arbitrary",),
            vmem_limit_bytes=_vmem_limit_bytes(n_pad, din_pad, d_pad)),
        cost_estimate=cost,
    )(x_pad, w0_pad, wl_stk, g_stk, b_stk)

    return out_pad[:n, :n_units]


def init_representation_net_params(key, n_unit_in, n_units, n_layers):
    """Deterministic parameter init matching the module's layer shapes."""
    params = []
    dims = [n_unit_in] + [n_units] * n_layers
    for i in range(n_layers):
        d_in, d_out = dims[i], dims[i + 1]
        key, kw, kb = jax.random.split(key, 3)
        bound = 1.0 / (d_in ** 0.5)                 # PyTorch Linear-style range
        w = jax.random.uniform(kw, (d_in, d_out), jnp.float32, -bound, bound)
        b = jax.random.uniform(kb, (1, d_out), jnp.float32, -bound, bound)
        gamma = jnp.ones((1, d_out), jnp.float32)   # BatchNorm1d default init
        beta = jnp.zeros((1, d_out), jnp.float32)
        params.append((w, b, gamma, beta))
    return params


def pack_representation_net_params(params):
    """Pad & stack parameters ONCE (hoisted out of the per-forward path)."""
    n_layers = len(params)
    d_in, n_units = params[0][0].shape
    din_pad = _round_up(d_in, LANE)
    d_pad = _round_up(n_units, LANE)

    # Layer-0 weight padded only along its true dims (no square padding).
    w0_pad = jnp.zeros((din_pad, d_pad), jnp.float32).at[:d_in, :n_units].set(
        params[0][0])

    # Layers 1..L-1 stream through the kernel; keep at least one block so the
    # operand is never empty (dummy zeros when n_layers == 1, never read).
    n_stream = max(n_layers - 1, 1)
    wl_stk = jnp.zeros((n_stream, d_pad, d_pad), jnp.float32)
    for l in range(1, n_layers):
        w = params[l][0]
        wl_stk = wl_stk.at[l - 1, :w.shape[0], :w.shape[1]].set(w)

    g_stk = jnp.ones((n_layers, 1, d_pad), jnp.float32)
    b_stk = jnp.zeros((n_layers, 1, d_pad), jnp.float32)
    for l, (_w, _bias, gamma, beta) in enumerate(params):
        g_stk = g_stk.at[l, :, :gamma.shape[1]].set(gamma)
        b_stk = b_stk.at[l, :, :beta.shape[1]].set(beta)
        # _bias intentionally unused: exact no-op under training-mode BN.

    return w0_pad, wl_stk, g_stk, b_stk, n_units


def _reference_forward(x, params):
    """Pure-JAX, spec-faithful reference (bias included, two-pass variance)."""
    for (w, b, gamma, beta) in params:
        h = x @ w + b
        mean = jnp.mean(h, axis=0, keepdims=True)
        var = jnp.mean((h - mean) ** 2, axis=0, keepdims=True)
        h = (h - mean) / jnp.sqrt(var + BN_EPS) * gamma + beta
        x = jnp.where(h > 0, h, jnp.exp(h) - 1.0)
    return x


if __name__ == "__main__":
    # Small tabular shapes consistent with the module; batch and feature sizes
    # deliberately not multiples of 8 / 128 to exercise padding + masked-BN.
    n_unit_in = 13
    n_units = 32
    n_layers = 3
    batch = 10

    key = jax.random.PRNGKey(0)
    key, kx = jax.random.split(key)
    x = jax.random.normal(kx, (batch, n_unit_in), jnp.float32)

    params = init_representation_net_params(key, n_unit_in, n_units, n_layers)
    w0_pad, wl_stk, g_stk, b_stk, n_out = pack_representation_net_params(params)

    out = representation_net_forward(x, w0_pad, wl_stk, g_stk, b_stk,
                                     n_units=n_out)
    out = jax.block_until_ready(out)

    ref = _reference_forward(x, params)
    assert out.shape == (batch, n_units), out.shape
    assert jnp.allclose(out, ref, atol=5e-4, rtol=5e-4), (
        "mismatch vs reference; max abs diff = "
        + str(float(jnp.max(jnp.abs(out - ref)))))

    print("KERNEL_OK")
</pallas_src>

<mosaic_0001>
module attributes {stable_mosaic.version = 11 : i64} {
  func.func @_rep_layer_kernel(%arg0: i32, %arg1: memref<16x128xf32, #tpu.memory_space<vmem>>, %arg2: memref<128x128xf32, #tpu.memory_space<vmem>>, %arg3: memref<1x128x128xf32, #tpu.memory_space<vmem>>, %arg4: memref<1x1x128xf32, #tpu.memory_space<vmem>>, %arg5: memref<1x1x128xf32, #tpu.memory_space<vmem>>, %arg6: memref<16x128xf32, #tpu.memory_space<vmem>>, %arg7: memref<16x128xf32, #tpu.memory_space<vmem>>) attributes {dimension_semantics = [#tpu.dimension_semantics<arbitrary>], iteration_bounds = array<i64: 3>, scalar_prefetch = 0 : i64, scratch_operands = 1 : i64, tpu.core_type = #tpu.core_type<tc>, window_params = [{pipeline_mode = #tpu.pipeline_mode<synchronous>, transform_indices = @transform_0, window_bounds = array<i64: 16, 128>}, {pipeline_mode = #tpu.pipeline_mode<synchronous>, transform_indices = @transform_1, window_bounds = array<i64: 128, 128>}, {transform_indices = @transform_2, window_bounds = array<i64: 1, 128, 128>}, {transform_indices = @transform_3, window_bounds = array<i64: 1, 1, 128>}, {transform_indices = @transform_4, window_bounds = array<i64: 1, 1, 128>}, {pipeline_mode = #tpu.pipeline_mode<synchronous>, transform_indices = @transform_5, window_bounds = array<i64: 16, 128>}]} {
    %c0_i32 = arith.constant 0 : i32
    %0 = arith.cmpi eq, %arg0, %c0_i32 : i32
    %1 = arith.extui %0 : i1 to i32
    %c0_i32_0 = arith.constant 0 : i32
    %2 = arith.cmpi ne, %1, %c0_i32_0 : i32
    scf.if %2 {
      %c0_20 = arith.constant 0 : index
      %c0_21 = arith.constant 0 : index
      %51 = vector.load %arg1[%c0_20, %c0_21] : memref<16x128xf32, #tpu.memory_space<vmem>>, vector<16x128xf32>
      %c0_22 = arith.constant 0 : index
      %c0_23 = arith.constant 0 : index
      %52 = vector.load %arg2[%c0_22, %c0_23] : memref<128x128xf32, #tpu.memory_space<vmem>>, vector<128x128xf32>
      %cst_24 = arith.constant dense<0.000000e+00> : vector<16x128xf32>
      %53 = tpu.matmul %51, %52, %cst_24 {dimension_numbers = #tpu.dot_dimension_numbers<[1], [0], [0], [1], [0, 0, 1, 1], [], []>} : vector<16x128xf32>, vector<128x128xf32>, vector<16x128xf32> -> vector<16x128xf32>
      %c0_25 = arith.constant 0 : index
      %c0_26 = arith.constant 0 : index
      %54 = vector.load %arg7[%c0_25, %c0_26] : memref<16x128xf32, #tpu.memory_space<vmem>>, vector<16x128xf32>
      tpu.vector_store %arg7[%c0_25, %c0_26], %53 {strides = array<i32>} : memref<16x128xf32, #tpu.memory_space<vmem>>, vector<16x128xf32>,
    } else {
    }
    %c0_i32_1 = arith.constant 0 : i32
    %3 = arith.cmpi sgt, %arg0, %c0_i32_1 : i32
    %4 = arith.extui %3 : i1 to i32
    %c0_i32_2 = arith.constant 0 : i32
    %5 = arith.cmpi ne, %4, %c0_i32_2 : i32
    scf.if %5 {
      %c0_20 = arith.constant 0 : index
      %c0_21 = arith.constant 0 : index
      %51 = vector.load %arg7[%c0_20, %c0_21] : memref<16x128xf32, #tpu.memory_space<vmem>>, vector<16x128xf32>
      %c0_22 = arith.constant 0 : index
      %c0_23 = arith.constant 0 : index
      %c0_24 = arith.constant 0 : index
      %52 = vector.load %arg3[%c0_22, %c0_23, %c0_24] : memref<1x128x128xf32, #tpu.memory_space<vmem>>, vector<1x128x128xf32>
      %53 = vector.shape_cast %52 : vector<1x128x128xf32> to vector<128x128xf32>
      %cst_25 = arith.constant dense<0.000000e+00> : vector<16x128xf32>
      %54 = tpu.matmul %51, %53, %cst_25 {dimension_numbers = #tpu.dot_dimension_numbers<[1], [0], [0], [1], [0, 0, 1, 1], [], []>} : vector<16x128xf32>, vector<128x128xf32>, vector<16x128xf32> -> vector<16x128xf32>
      %c0_26 = arith.constant 0 : index
      %c0_27 = arith.constant 0 : index
      %55 = vector.load %arg7[%c0_26, %c0_27] : memref<16x128xf32, #tpu.memory_space<vmem>>, vector<16x128xf32>
      tpu.vector_store %arg7[%c0_26, %c0_27], %54 {strides = array<i32>} : memref<16x128xf32, #tpu.memory_space<vmem>>, vector<16x128xf32>,
    } else {
    }
    %c0 = arith.constant 0 : index
    %c0_3 = arith.constant 0 : index
    %6 = vector.load %arg7[%c0, %c0_3] : memref<16x128xf32, #tpu.memory_space<vmem>>, vector<16x128xf32>
    %cst = arith.constant dense<0.000000e+00> : vector<128xf32>
    %7 = vector.multi_reduction <add>, %6, %cst [0] : vector<16x128xf32> to vector<128xf32>
    %8 = vector.shape_cast %7 : vector<128xf32> to vector<1x128xf32>
    %9 = arith.mulf %6, %6 : vector<16x128xf32>
    %cst_4 = arith.constant dense<0.000000e+00> : vector<128xf32>
    %10 = vector.multi_reduction <add>, %9, %cst_4 [0] : vector<16x128xf32> to vector<128xf32>
    %11 = vector.shape_cast %10 : vector<128xf32> to vector<1x128xf32>
    %cst_5 = arith.constant 1.000000e-01 : f32
    %12 = vector.broadcast %cst_5 : f32 to vector<1x128xf32>
    %13 = arith.mulf %8, %12 : vector<1x128xf32>
    %cst_6 = arith.constant 1.000000e-01 : f32
    %14 = vector.broadcast %cst_6 : f32 to vector<1x128xf32>
    %15 = arith.mulf %11, %14 : vector<1x128xf32>
    %16 = arith.mulf %13, %13 : vector<1x128xf32>
    %17 = arith.subf %15, %16 : vector<1x128xf32>
    %cst_7 = arith.constant 9.99999974E-6 : f32
    %18 = vector.broadcast %cst_7 : f32 to vector<1x128xf32>
    %19 = arith.addf %17, %18 : vector<1x128xf32>
    %20 = math.rsqrt %19 : vector<1x128xf32>
    %c0_8 = arith.constant 0 : index
    %c0_9 = arith.constant 0 : index
    %c0_10 = arith.constant 0 : index
    %21 = vector.load %arg4[%c0_8, %c0_9, %c0_10] : memref<1x1x128xf32, #tpu.memory_space<vmem>>, vector<1x1x128xf32>
    %22 = vector.shape_cast %21 : vector<1x1x128xf32> to vector<1x128xf32>
    %23 = arith.mulf %20, %22 : vector<1x128xf32>
    %c0_11 = arith.constant 0 : index
    %c0_12 = arith.constant 0 : index
    %c0_13 = arith.constant 0 : index
    %24 = vector.load %arg5[%c0_11, %c0_12, %c0_13] : memref<1x1x128xf32, #tpu.memory_space<vmem>>, vector<1x1x128xf32>
    %25 = vector.shape_cast %24 : vector<1x1x128xf32> to vector<1x128xf32>
    %26 = arith.mulf %13, %23 : vector<1x128xf32>
    %27 = arith.subf %25, %26 : vector<1x128xf32>
    %28 = vector.broadcast %23 : vector<1x128xf32> to vector<16x128xf32>
    %29 = arith.mulf %6, %28 : vector<16x128xf32>
    %30 = vector.broadcast %27 : vector<1x128xf32> to vector<16x128xf32>
    %31 = arith.addf %29, %30 : vector<16x128xf32>
    %cst_14 = arith.constant 0.000000e+00 : f32
    %32 = vector.broadcast %cst_14 : f32 to vector<16x128xf32>
    %33 = arith.cmpf ogt, %31, %32 : vector<16x128xf32>
    %cst_15 = arith.constant 0.000000e+00 : f32
    %34 = vector.broadcast %cst_15 : f32 to vector<16x128xf32>
    %35 = arith.minimumf %31, %34 : vector<16x128xf32>
    %36 = math.exp %35 : vector<16x128xf32>
    %cst_16 = arith.constant 1.000000e+00 : f32
    %37 = vector.broadcast %cst_16 : f32 to vector<16x128xf32>
    %38 = arith.subf %36, %37 : vector<16x128xf32>
    %39 = arith.select %33, %31, %38 : vector<16x128xi1>, vector<16x128xf32>
    %40 = tpu.iota {dimensions = array<i32: 0>} : vector<16x1xi32>
    %c10_i32 = arith.constant 10 : i32
    %41 = vector.broadcast %c10_i32 : i32 to vector<16x1xi32>
    %42 = arith.cmpi slt, %40, %41 : vector<16x1xi32>
    %43 = arith.extui %42 : vector<16x1xi1> to vector<16x1xi32>
    %44 = arith.sitofp %43 : vector<16x1xi32> to vector<16x1xf32>
    %45 = vector.broadcast %44 : vector<16x1xf32> to vector<16x128xf32>
    %46 = arith.mulf %39, %45 : vector<16x128xf32>
    %c0_17 = arith.constant 0 : index
    %c0_18 = arith.constant 0 : index
    %47 = vector.load %arg7[%c0_17, %c0_18] : memref<16x128xf32, #tpu.memory_space<vmem>>, vector<16x128xf32>
    tpu.vector_store %arg7[%c0_17, %c0_18], %46 {strides = array<i32>} : memref<16x128xf32, #tpu.memory_space<vmem>>, vector<16x128xf32>,
    %c2_i32 = arith.constant 2 : i32
    %48 = arith.cmpi eq, %arg0, %c2_i32 : i32
    %49 = arith.extui %48 : i1 to i32
    %c0_i32_19 = arith.constant 0 : i32
    %50 = arith.cmpi ne, %49, %c0_i32_19 : i32
    scf.if %50 {
      %c0_20 = arith.constant 0 : index
      %c0_21 = arith.constant 0 : index
      %51 = vector.load %arg6[%c0_20, %c0_21] : memref<16x128xf32, #tpu.memory_space<vmem>>, vector<16x128xf32>
      tpu.vector_store %arg6[%c0_20, %c0_21], %46 {strides = array<i32>} : memref<16x128xf32, #tpu.memory_space<vmem>>, vector<16x128xf32>,
    } else {
    }
    return
  }
  func.func @transform_0(%arg0: i32) -> (i32, i32) {
    %c0_i32 = arith.constant 0 : i32
    %c0_i32_0 = arith.constant 0 : i32
    %c0_i32_1 = arith.constant 0 : i32
    return %c0_i32, %c0_i32_0 : i32, i32
  }
  func.func @transform_1(%arg0: i32) -> (i32, i32) {
    %c0_i32 = arith.constant 0 : i32
    %c0_i32_0 = arith.constant 0 : i32
    %c0_i32_1 = arith.constant 0 : i32
    return %c0_i32, %c0_i32_0 : i32, i32
  }
  func.func @transform_2(%arg0: i32) -> (i32, i32, i32) {
    %c1_i32 = arith.constant 1 : i32
    %0 = arith.subi %arg0, %c1_i32 : i32
    %c0_i32 = arith.constant 0 : i32
    %1 = arith.maxsi %0, %c0_i32 : i32
    %c0_i32_0 = arith.constant 0 : i32
    %c0_i32_1 = arith.constant 0 : i32
    %c0_i32_2 = arith.constant 0 : i32
    return %1, %c0_i32_0, %c0_i32_1 : i32, i32, i32
  }
  func.func @transform_3(%arg0: i32) -> (i32, i32, i32) {
    %c0_i32 = arith.constant 0 : i32
    %c0_i32_0 = arith.constant 0 : i32
    %c0_i32_1 = arith.constant 0 : i32
    return %arg0, %c0_i32, %c0_i32_0 : i32, i32, i32
  }
  func.func @transform_4(%arg0: i32) -> (i32, i32, i32) {
    %c0_i32 = arith.constant 0 : i32
    %c0_i32_0 = arith.constant 0 : i32
    %c0_i32_1 = arith.constant 0 : i32
    return %arg0, %c0_i32, %c0_i32_0 : i32, i32, i32
  }
  func.func @transform_5(%arg0: i32) -> (i32, i32) {
    %c0_i32 = arith.constant 0 : i32
    %c0_i32_0 = arith.constant 0 : i32
    %c0_i32_1 = arith.constant 0 : i32
    return %c0_i32, %c0_i32_0 : i32, i32
  }
}

</mosaic_0001>

<llo_original>
// kernel: representation_net_forward.1
$region0: #{representation_net_forward.1}
  #allocation0 [shape = 'u32[]', space=smem, size = 0x4, offset = 0x4, fixed_abs, tag = 'smem constant byte address 0x4 - core index']
  #allocation1 [shape = 'u32[144,128]{1,0:T(1,128)}', space=vmem, size = 0x12000, scoped, tag = 'internal scratch']
  #allocation2 [shape = 'f32[16,128]{1,0:T(8,128)}', space=vmem, size = 0x2000, scoped, tag = 'scratch operand']
  %s0 = inlined_call_operand.vmem [shape: f32[16,128], index: 0, kind: input, shape index: {}]
  %s1 = inlined_call_operand.hbm [shape: f32[128,128], index: 1, kind: input, shape index: {}]
  %s2 = inlined_call_operand.hbm [shape: f32[2,128,128], index: 2, kind: input, shape index: {}]
  %s3 = inlined_call_operand.vmem [shape: f32[3,1,128], index: 3, kind: input, shape index: {}]
  %s4 = inlined_call_operand.vmem [shape: f32[3,1,128], index: 4, kind: input, shape index: {}]
  %s5 = inlined_call_operand.hbm [shape: f32[16,128], index: 5, kind: output, shape index: {}]
  %s6 = sld [smem:[#allocation0]]
  $region73: #{representation_net_forward.1} parent=0
    _
  %s8 = ssub.s32 1, %s6
  %s9 = scalar_select 0, %s8, %s6
  $region1: #{representation_net_forward.1} parent=0
    #allocation3 [shape = 'u8[65536]{0}', space=vmem, size = 0x10000, scoped, tag = 'input window, operand 1, single buffered']
    #allocation4 [shape = 's32[2]{0}', space=sflag, size = 0x8, scoped, tag = 'scoped memory for representation_net_forward.1']
    #allocation5 [shape = 's32[2]{0}', space=sflag, size = 0x8, scoped, tag = 'scoped memory for representation_net_forward.1']
    #allocation6 [shape = 'u8[131072]{0}', space=vmem, size = 0x20000, scoped, tag = 'input window, operand 2']
    #allocation7 [shape = 's32[2]{0}', space=sflag, size = 0x8, scoped, tag = 'scoped memory for representation_net_forward.1']
    #allocation8 [shape = 'u8[8192]{0}', space=vmem, size = 0x2000, scoped, tag = 'output window, operand 0, single buffered']
    %10 = vsyncpa [#allocation4], 0
    %11 = vsyncpa [#allocation7], 0
    %s12 = scalar_lea.sflag [#allocation7], 1
    %13 = vsyncpa %s12, 0
    %14 = vsyncpa [#allocation5], 0
    loop: start=0, step=1, limit=5
    $region2: #{representation_net_forward.1} parent=1 // loop_pre_header
      _
    $region3: #{representation_net_forward.1} parent=1 // loop_header
      %s16 = sphi 0, %s20
      %p17 = scmp.ge.s32.totalorder %s16, 5
      %s24 = sphi 0, %s24
      %s26 = sphi 0, %s24
      %s27 = sphi 0, %s26
      %s41 = sphi 0, %s27
      %s45 = sphi 0, %s45
      %s47 = sphi 0, %s45
      %s48 = sphi 0, %s47
      %s62 = sphi 0, %s48
      %s74 = sphi 0, %s76
      %s77 = sphi 0, %s74
      %s78 = sphi 0, %s77
      %s94 = sphi 0, %s78
      %s100 = sphi 0, %s102
      %s103 = sphi 0, %s100
      %s104 = sphi 0, %s103
      %s120 = sphi 0, %s104
      %s126 = sphi 0, %s128
      %s129 = sphi 0, %s126
      %s130 = sphi 0, %s129
      %s146 = sphi 0, %s130
      %s150 = sphi 0, %s150
      %s152 = sphi 0, %s150
      %s153 = sphi 0, %s152
      %s167 = sphi 0, %s153
    $region4: #{representation_net_forward.1} parent=1 // loop_header_branch
      %19 = sbr.rel (%p17) target = $region8
    $region5: #{representation_net_forward.1} parent=1 // loop_body
      %s21 = ssub.s32 %s16, 1
      %s22 = ssub.s32 %s16, 2
      %s23 = sadd.s32 %s16, 1
      %s25 = sadd.s32 %s24, 1
      %p28 = scmp.eq.s32.totalorder %s16, 2
      %p29 = scmp.ne.s32.totalorder %s24, %s26
      %p30 = scmp.eq.s32.totalorder %s16, 0
      %p31 = por %p29, %p30
      %p32 = scmp.ne.s32.totalorder %s24, %s26
      %p33 = scmp.eq.s32.totalorder %s21, 2
      %p34 = por %p32, %p33
      %p35 = scmp.ne.s32.totalorder %s26, %s27
      %p36 = scmp.eq.s32.totalorder %s21, 0
      %p37 = por %p35, %p36
      %p38 = scmp.ne.s32.totalorder %s26, %s27
      %p39 = scmp.eq.s32.totalorder %s22, 2
      %p40 = por %p38, %p39
      %p42 = scmp.ne.s32.totalorder %s27, %s41
      %p43 = scmp.eq.s32.totalorder %s22, 0
      %p44 = por %p42, %p43
      %s46 = sadd.s32 %s45, 1
      %p49 = scmp.eq.s32.totalorder %s16, 2
      %p50 = scmp.ne.s32.totalorder %s45, %s47
      %p51 = scmp.eq.s32.totalorder %s16, 0
      %p52 = por %p50, %p51
      %p53 = scmp.ne.s32.totalorder %s45, %s47
      %p54 = scmp.eq.s32.totalorder %s21, 2
      %p55 = por %p53, %p54
      %p56 = scmp.ne.s32.totalorder %s47, %s48
      %p57 = scmp.eq.s32.totalorder %s21, 0
      %p58 = por %p56, %p57
      %p59 = scmp.ne.s32.totalorder %s47, %s48
      %p60 = scmp.eq.s32.totalorder %s22, 2
      %p61 = por %p59, %p60
      %p63 = scmp.ne.s32.totalorder %s48, %s62
      %p64 = scmp.eq.s32.totalorder %s22, 0
      %p65 = por %p63, %p64
      %s66 = ssub.s32 %s16, 1
      %p67 = scmp.gt.s32.totalorder %s66, 0
      %s68 = scalar_select %p67, %s66, 0
      %s69 = ssub.s32 %s23, 1
      %p70 = scmp.gt.s32.totalorder %s69, 0
      %s71 = scalar_select %p70, %s69, 0
      %s72 = ssub.s32 %s68, %s71
      %p73 = scmp.eq.s32.totalorder %s72, 0
      %s75 = sadd.s32 %s74, 1
      %s76 = scalar_select %p73, %s74, %s75
      %p79 = pneg %p73
      %p80 = scmp.eq.s32.totalorder %s16, 2
      %p81 = por %p79, %p80
      %p82 = scmp.ne.s32.totalorder %s74, %s77
      %p83 = scmp.eq.s32.totalorder %s16, 0
      %p84 = por %p82, %p83
      %p85 = scmp.ne.s32.totalorder %s74, %s77
      %p86 = scmp.eq.s32.totalorder %s21, 2
      %p87 = por %p85, %p86
      %p88 = scmp.ne.s32.totalorder %s77, %s78
      %p89 = scmp.eq.s32.totalorder %s21, 0
      %p90 = por %p88, %p89
      %p91 = scmp.ne.s32.totalorder %s77, %s78
      %p92 = scmp.eq.s32.totalorder %s22, 2
      %p93 = por %p91, %p92
      %p95 = scmp.ne.s32.totalorder %s78, %s94
      %p96 = scmp.eq.s32.totalorder %s22, 0
      %p97 = por %p95, %p96
      %s98 = ssub.s32 %s16, %s23
      %p99 = scmp.eq.s32.totalorder %s98, 0
      %s101 = sadd.s32 %s100, 1
      %s102 = scalar_select %p99, %s100, %s101
      %p105 = pneg %p99
      %p106 = scmp.eq.s32.totalorder %s16, 2
      %p107 = por %p105, %p106
      %p108 = scmp.ne.s32.totalorder %s100, %s103
      %p109 = scmp.eq.s32.totalorder %s16, 0
      %p110 = por %p108, %p109
      %p111 = scmp.ne.s32.totalorder %s100, %s103
      %p112 = scmp.eq.s32.totalorder %s21, 2
      %p113 = por %p111, %p112
      %p114 = scmp.ne.s32.totalorder %s103, %s104
      %p115 = scmp.eq.s32.totalorder %s21, 0
      %p116 = por %p114, %p115
      %p117 = scmp.ne.s32.totalorder %s103, %s104
      %p118 = scmp.eq.s32.totalorder %s22, 2
      %p119 = por %p117, %p118
      %p121 = scmp.ne.s32.totalorder %s104, %s120
      %p122 = scmp.eq.s32.totalorder %s22, 0
      %p123 = por %p121, %p122
      %s124 = ssub.s32 %s16, %s23
      %p125 = scmp.eq.s32.totalorder %s124, 0
      %s127 = sadd.s32 %s126, 1
      %s128 = scalar_select %p125, %s126, %s127
      %p131 = pneg %p125
      %p132 = scmp.eq.s32.totalorder %s16, 2
      %p133 = por %p131, %p132
      %p134 = scmp.ne.s32.totalorder %s126, %s129
      %p135 = scmp.eq.s32.totalorder %s16, 0
      %p136 = por %p134, %p135
      %p137 = scmp.ne.s32.totalorder %s126, %s129
      %p138 = scmp.eq.s32.totalorder %s21, 2
      %p139 = por %p137, %p138
      %p140 = scmp.ne.s32.totalorder %s129, %s130
      %p141 = scmp.eq.s32.totalorder %s21, 0
      %p142 = por %p140, %p141
      %p143 = scmp.ne.s32.totalorder %s129, %s130
      %p144 = scmp.eq.s32.totalorder %s22, 2
      %p145 = por %p143, %p144
      %p147 = scmp.ne.s32.totalorder %s130, %s146
      %p148 = scmp.eq.s32.totalorder %s22, 0
      %p149 = por %p147, %p148
      %s151 = sadd.s32 %s150, 1
      %p154 = scmp.eq.s32.totalorder %s16, 2
      %p155 = scmp.ne.s32.totalorder %s150, %s152
      %p156 = scmp.eq.s32.totalorder %s16, 0
      %p157 = por %p155, %p156
      %p158 = scmp.ne.s32.totalorder %s150, %s152
      %p159 = scmp.eq.s32.totalorder %s21, 2
      %p160 = por %p158, %p159
      %p161 = scmp.ne.s32.totalorder %s152, %s153
      %p162 = scmp.eq.s32.totalorder %s21, 0
      %p163 = por %p161, %p162
      %p164 = scmp.ne.s32.totalorder %s152, %s153
      %p165 = scmp.eq.s32.totalorder %s22, 2
      %p166 = por %p164, %p165
      %p168 = scmp.ne.s32.totalorder %s153, %s167
      %p169 = scmp.eq.s32.totalorder %s22, 0
      %p170 = por %p168, %p169
      %p171 = scmp.le.s32.totalorder 1, %s16
      %p172 = scmp.lt.s32.totalorder %s16, 4
      %p173 = pnand %p171, %p172
      %p174 = pneg %p173
      // Predicated region
      $region9: #{representation_net_forward.1} parent=5 // pred_check
        _
      $region10: #{representation_net_forward.1} parent=5 // pred_check_branch
        %176 = sbr.rel (%p173) target = $region12
      $region11: #{representation_net_forward.1} parent=5 // pred_region
        %s177 = ssub.s32 %s16, 1
        // Predicated region
        $region13: #{representation_net_forward.1} parent=11 // pred_check
          %p178 = pneg %p37
        $region14: #{representation_net_forward.1} parent=11 // pred_check_branch
          %180 = sbr.rel (%p178) target = $region16
        $region15: #{representation_net_forward.1} parent=11 // pred_region
          _
        $region16: #{representation_net_forward.1} parent=11 // pred_fallthru
          _
        // Predicated region
        $region17: #{representation_net_forward.1} parent=11 // pred_check
          %p181 = pneg %p58
        $region18: #{representation_net_forward.1} parent=11 // pred_check_branch
          %183 = sbr.rel (%p181) target = $region20
        $region19: #{representation_net_forward.1} parent=11 // pred_region
          %s185 = ssub.s32 2048, 2048
          %186 = vsyncadd [#allocation4], %s185
          %s187 = sshll.u32 [#allocation3], 4
          %s188 = int_to_ptr.vmem [resolvable:$true] %s187
          %193 = dma.hbm_to_vmem [thread:$0]  %s1, 2048, %s188, [#allocation4], 128, 128, 8
        $region20: #{representation_net_forward.1} parent=11 // pred_fallthru
          _
      $region12: #{representation_net_forward.1} parent=5 // pred_fallthru
        _
      %p194 = scmp.lt.s32.totalorder %s16, 3
      // Predicated region
      $region21: #{representation_net_forward.1} parent=5 // pred_check
        %p195 = pneg %p194
      $region22: #{representation_net_forward.1} parent=5 // pred_check_branch
        %197 = sbr.rel (%p195) target = $region24
      $region23: #{representation_net_forward.1} parent=5 // pred_region
        // Predicated region
        $region25: #{representation_net_forward.1} parent=23 // pred_check
          %p198 = pneg %p84
        $region26: #{representation_net_forward.1} parent=23 // pred_check_branch
          %200 = sbr.rel (%p198) target = $region28
        $region27: #{representation_net_forward.1} parent=23 // pred_region
          %s201 = sand.u32 %s74, 1
          %s202 = scalar_lea.sflag [#allocation7], %s201
          %s203 = sand.u32 %s74, 1
          %s204 = smul.addr %s203, 128
          %s205 = scalar_lea.vmem [#allocation6], %s204
          %s206 = ssub.s32 %s16, 1
          %p207 = scmp.gt.s32.totalorder %s206, 0
          %s208 = scalar_select %p207, %s206, 0
          %s210 = ssub.s32 2048, 2048
          %211 = vsyncadd %s202, %s210
          %s212 = smul.addr %s208, 16
          %s213 = smul.addr %s212, 128
          %s214 = scalar_lea.hbm %s2, %s213
          %s215 = sshll.u32 %s205, 4
          %s216 = int_to_ptr.vmem [resolvable:$true] %s215
          %221 = dma.hbm_to_vmem [thread:$0]  %s214, 2048, %s216, %s202, 128, 128, 8
        $region28: #{representation_net_forward.1} parent=23 // pred_fallthru
          _
        // Predicated region
        $region29: #{representation_net_forward.1} parent=23 // pred_check
          %p222 = pneg %p110
        $region30: #{representation_net_forward.1} parent=23 // pred_check_branch
          %224 = sbr.rel (%p222) target = $region32
        $region31: #{representation_net_forward.1} parent=23 // pred_region
          %p225 = scmp.lt.s32.totalorder %s16, 2
          %s226 = scalar_select %p225, %s16, 2
          %s227 = scalar_lea.vmem %s3, %s226
        $region32: #{representation_net_forward.1} parent=23 // pred_fallthru
          _
        // Predicated region
        $region33: #{representation_net_forward.1} parent=23 // pred_check
          %p228 = pneg %p136
        $region34: #{representation_net_forward.1} parent=23 // pred_check_branch
          %230 = sbr.rel (%p228) target = $region36
        $region35: #{representation_net_forward.1} parent=23 // pred_region
          %p231 = scmp.lt.s32.totalorder %s16, 2
          %s232 = scalar_select %p231, %s16, 2
          %s233 = scalar_lea.vmem %s4, %s232
        $region36: #{representation_net_forward.1} parent=23 // pred_fallthru
          _
      $region24: #{representation_net_forward.1} parent=5 // pred_fallthru
        _
      %p234 = scmp.le.s32.totalorder 1, %s16
      %p235 = scmp.lt.s32.totalorder %s16, 4
      %p236 = pnand %p234, %p235
      %p237 = pneg %p236
      // Predicated region
      $region37: #{representation_net_forward.1} parent=5 // pred_check
        _
      $region38: #{representation_net_forward.1} parent=5 // pred_check_branch
        %239 = sbr.rel (%p236) target = $region40
      $region39: #{representation_net_forward.1} parent=5 // pred_region
        %s240 = ssub.s32 %s16, 1
        // Predicated region
        $region41: #{representation_net_forward.1} parent=39 // pred_check
          %p241 = pneg %p58
        $region42: #{representation_net_forward.1} parent=39 // pred_check_branch
          %243 = sbr.rel (%p241) target = $region44
        $region43: #{representation_net_forward.1} parent=39 // pred_region
          %244 = dma.done [#allocation4], 2048
        $region44: #{representation_net_forward.1} parent=39 // pred_fallthru
          _
        %s245 = sand.u32 %s77, 1
        %s246 = scalar_lea.sflag [#allocation7], %s245
        %s247 = sand.u32 %s77, 1
        %s248 = smul.addr %s247, 128
        %s249 = scalar_lea.vmem [#allocation6], %s248
        // Predicated region
        $region45: #{representation_net_forward.1} parent=39 // pred_check
          %p250 = pneg %p90
        $region46: #{representation_net_forward.1} parent=39 // pred_check_branch
          %252 = sbr.rel (%p250) target = $region48
        $region47: #{representation_net_forward.1} parent=39 // pred_region
          %253 = dma.done %s246, 2048
        $region48: #{representation_net_forward.1} parent=39 // pred_fallthru
          _
        %p254 = pneg %p37
        %p255 = pneg %p34
        %p256 = pneg %p58
        %p257 = pneg %p55
        %s258 = sand.u32 %s77, 1
        %s259 = scalar_lea.sflag [#allocation7], %s258
        %s260 = sand.u32 %s77, 1
        %s261 = smul.addr %s260, 128
        %s262 = scalar_lea.vmem [#allocation6], %s261
        %p263 = pneg %p90
        %p264 = pneg %p87
        %p265 = scmp.lt.s32.totalorder %s21, 2
        %s266 = scalar_select %p265, %s21, 2
        %s267 = scalar_lea.vmem %s3, %s266
        %p268 = pneg %p116
        %p269 = pneg %p113
        %p270 = scmp.lt.s32.totalorder %s21, 2
        %s271 = scalar_select %p270, %s21, 2
        %s272 = scalar_lea.vmem %s4, %s271
        %p273 = pneg %p142
        %p274 = pneg %p139
        %p275 = pneg %p163
        %p276 = pneg %p160
        %s277 = ssub.s32 %s21, 1
        %p278 = scmp.gt.s32.totalorder %s277, 0
        %s279 = scalar_select %p278, %s277, 0
        %p280 = scmp.lt.s32.totalorder %s21, 2
        %s281 = scalar_select %p280, %s21, 2
        %s282 = scalar_lea.vmem %s3, %s281
        %p283 = scmp.lt.s32.totalorder %s21, 2
        %s284 = scalar_select %p283, %s21, 2
        %s285 = scalar_lea.vmem %s4, %s284
        %p286 = scmp.eq.s32.totalorder %s21, 0
        // Predicated region
        $region49: #{representation_net_forward.1} parent=39 // pred_check
          %p287 = pneg %p286
        $region50: #{representation_net_forward.1} parent=39 // pred_check_branch
          %289 = sbr.rel (%p287) target = $region52
        $region51: #{representation_net_forward.1} parent=39 // pred_region
          %v290 = vld [vmem:[%s0] sm:$0xff]
          %v291 = vld [vmem:[%s0 + $0x8] sm:$0xff]
          %v292 = vld [vmem:[#allocation3] sm:$0xff]
          %v293 = vld [vmem:[#allocation3 + $0x8] sm:$0xff]
          %v294 = vld [vmem:[#allocation3 + $0x10] sm:$0xff]
          %v295 = vld [vmem:[#allocation3 + $0x18] sm:$0xff]
          %v296 = vld [vmem:[#allocation3 + $0x20] sm:$0xff]
          %v297 = vld [vmem:[#allocation3 + $0x28] sm:$0xff]
          %v298 = vld [vmem:[#allocation3 + $0x30] sm:$0xff]
          %v299 = vld [vmem:[#allocation3 + $0x38] sm:$0xff]
          %v300 = vld [vmem:[#allocation3 + $0x40] sm:$0xff]
          %v301 = vld [vmem:[#allocation3 + $0x48] sm:$0xff]
          %v302 = vld [vmem:[#allocation3 + $0x50] sm:$0xff]
          %v303 = vld [vmem:[#allocation3 + $0x58] sm:$0xff]
          %v304 = vld [vmem:[#allocation3 + $0x60] sm:$0xff]
          %v305 = vld [vmem:[#allocation3 + $0x68] sm:$0xff]
          %v306 = vld [vmem:[#allocation3 + $0x70] sm:$0xff]
          %v307 = vld [vmem:[#allocation3 + $0x78] sm:$0xff]
          %308 = vmatprep.subr.mxu0 0.0
          %309 = vmatpush1.msra.mxu0 %v292
          %310 = vmatprep.subr.mxu0 0.0
          %311 = vmatpush1.msra.mxu0 %v293
          %312 = vmatprep.subr.mxu0 0.0
          %313 = vmatpush1.msra.mxu0 %v294
          %314 = vmatprep.subr.mxu0 0.0
          %315 = vmatpush1.msra.mxu0 %v295
          %316 = vmatprep.subr.mxu0 0.0
          %317 = vmatpush1.msra.mxu0 %v296
          %318 = vmatprep.subr.mxu0 0.0
          %319 = vmatpush1.msra.mxu0 %v297
          %320 = vmatprep.subr.mxu0 0.0
          %321 = vmatpush1.msra.mxu0 %v298
          %322 = vmatprep.subr.mxu0 0.0
          %323 = vmatpush1.msra.mxu0 %v299
          %324 = vmatprep.subr.mxu0 0.0
          %325 = vmatpush1.msra.mxu0 %v300
          %326 = vmatprep.subr.mxu0 0.0
          %327 = vmatpush1.msra.mxu0 %v301
          %328 = vmatprep.subr.mxu0 0.0
          %329 = vmatpush1.msra.mxu0 %v302
          %330 = vmatprep.subr.mxu0 0.0
          %331 = vmatpush1.msra.mxu0 %v303
          %332 = vmatprep.subr.mxu0 0.0
          %333 = vmatpush1.msra.mxu0 %v304
          %334 = vmatprep.subr.mxu0 0.0
          %335 = vmatpush1.msra.mxu0 %v305
          %336 = vmatprep.subr.mxu0 0.0
          %337 = vmatpush1.msra.mxu0 %v306
          %338 = vmatprep.subr.mxu0 0.0
          %339 = vmatpush1.msra.mxu0 %v307
          %340 = vmatprep.subr.mxu0 0.0
          %341 = vmatpush1.msra.mxu0 0.0
          %342 = vmatprep.subr.mxu0 0.0
          %343 = vmatpush1.msra.mxu0 0.0
          %344 = vmatprep.subr.mxu0 0.0
          %345 = vmatpush1.msra.mxu0 0.0
          %346 = vmatprep.subr.mxu0 0.0
          %347 = vmatpush1.msra.mxu0 0.0
          %348 = vmatprep.subr.mxu0 0.0
          %349 = vmatpush1.msra.mxu0 0.0
          %350 = vmatprep.subr.mxu0 0.0
          %351 = vmatpush1.msra.mxu0 0.0
          %352 = vmatprep.subr.mxu0 0.0
          %353 = vmatpush1.msra.mxu0 0.0
          %354 = vmatprep.subr.mxu0 0.0
          %355 = vmatpush1.msra.mxu0 0.0
          %356 = vmatprep.subr.mxu0 0.0
          %357 = vmatpush1.msra.mxu0 0.0
          %358 = vmatprep.subr.mxu0 0.0
          %359 = vmatpush1.msra.mxu0 0.0
          %360 = vmatprep.subr.mxu0 0.0
          %361 = vmatpush1.msra.mxu0 0.0
          %362 = vmatprep.subr.mxu0 0.0
          %363 = vmatpush1.msra.mxu0 0.0
          %364 = vmatprep.subr.mxu0 0.0
          %365 = vmatpush1.msra.mxu0 0.0
          %366 = vmatprep.subr.mxu0 0.0
          %367 = vmatpush1.msra.mxu0 0.0
          %368 = vmatprep.subr.mxu0 0.0
          %369 = vmatpush1.msra.mxu0 0.0
          %370 = vmatprep.subr.mxu0 0.0
          %371 = vmatpush1.msra.mxu0 0.0
          %372 = vmatprep.mubr.f32.mxu0 0.0
          %373 = vmatmul.mubr.f32.gmra.mrb[0].mxu0 %v290
          %v374 = vpop.f32.mrb[0].mxu0
          %v375 = vadd.f32 0.0, %v374
          %v376 = vpop.f32.mrb[0].mxu0
          %377 = vmatprep.mubr.f32.mxu0 0.0
          %378 = vmatmul.mubr.f32.gmra.mrb[0].mxu0 %v291
          %v379 = vpop.f32.mrb[0].mxu0
          %v380 = vadd.f32 0.0, %v379
          %v381 = vpop.f32.mrb[0].mxu0
          %382 = vdwg.mxu0
          %383 = vst [vmem:[#allocation2] sm:$0xff] %v375
          %384 = vst [vmem:[#allocation2 + $0x8] sm:$0xff] %v380
        $region52: #{representation_net_forward.1} parent=39 // pred_fallthru
          _
        %p385 = scmp.gt.s32.totalorder %s21, 0
        // Predicated region
        $region53: #{representation_net_forward.1} parent=39 // pred_check
          %p386 = pneg %p385
        $region54: #{representation_net_forward.1} parent=39 // pred_check_branch
          %388 = sbr.rel (%p386) target = $region56
        $region55: #{representation_net_forward.1} parent=39 // pred_region
          %v389 = vld [vmem:[#allocation2] sm:$0xff]
          %v390 = vld [vmem:[#allocation2 + $0x8] sm:$0xff]
          %v391 = vld [vmem:[%s249] sm:$0xff]
          %v392 = vld [vmem:[%s249 + $0x8] sm:$0xff]
          %v393 = vld [vmem:[%s249 + $0x10] sm:$0xff]
          %v394 = vld [vmem:[%s249 + $0x18] sm:$0xff]
          %v395 = vld [vmem:[%s249 + $0x20] sm:$0xff]
          %v396 = vld [vmem:[%s249 + $0x28] sm:$0xff]
          %v397 = vld [vmem:[%s249 + $0x30] sm:$0xff]
          %v398 = vld [vmem:[%s249 + $0x38] sm:$0xff]
          %v399 = vld [vmem:[%s249 + $0x40] sm:$0xff]
          %v400 = vld [vmem:[%s249 + $0x48] sm:$0xff]
          %v401 = vld [vmem:[%s249 + $0x50] sm:$0xff]
          %v402 = vld [vmem:[%s249 + $0x58] sm:$0xff]
          %v403 = vld [vmem:[%s249 + $0x60] sm:$0xff]
          %v404 = vld [vmem:[%s249 + $0x68] sm:$0xff]
          %v405 = vld [vmem:[%s249 + $0x70] sm:$0xff]
          %v406 = vld [vmem:[%s249 + $0x78] sm:$0xff]
          %407 = vmatprep.subr.mxu0 0.0
          %408 = vmatpush1.msra.mxu0 %v391
          %409 = vmatprep.subr.mxu0 0.0
          %410 = vmatpush1.msra.mxu0 %v392
          %411 = vmatprep.subr.mxu0 0.0
          %412 = vmatpush1.msra.mxu0 %v393
          %413 = vmatprep.subr.mxu0 0.0
          %414 = vmatpush1.msra.mxu0 %v394
          %415 = vmatprep.subr.mxu0 0.0
          %416 = vmatpush1.msra.mxu0 %v395
          %417 = vmatprep.subr.mxu0 0.0
          %418 = vmatpush1.msra.mxu0 %v396
          %419 = vmatprep.subr.mxu0 0.0
          %420 = vmatpush1.msra.mxu0 %v397
          %421 = vmatprep.subr.mxu0 0.0
          %422 = vmatpush1.msra.mxu0 %v398
          %423 = vmatprep.subr.mxu0 0.0
          %424 = vmatpush1.msra.mxu0 %v399
          %425 = vmatprep.subr.mxu0 0.0
          %426 = vmatpush1.msra.mxu0 %v400
          %427 = vmatprep.subr.mxu0 0.0
          %428 = vmatpush1.msra.mxu0 %v401
          %429 = vmatprep.subr.mxu0 0.0
          %430 = vmatpush1.msra.mxu0 %v402
          %431 = vmatprep.subr.mxu0 0.0
          %432 = vmatpush1.msra.mxu0 %v403
          %433 = vmatprep.subr.mxu0 0.0
          %434 = vmatpush1.msra.mxu0 %v404
          %435 = vmatprep.subr.mxu0 0.0
          %436 = vmatpush1.msra.mxu0 %v405
          %437 = vmatprep.subr.mxu0 0.0
          %438 = vmatpush1.msra.mxu0 %v406
          %439 = vmatprep.subr.mxu0 0.0
          %440 = vmatpush1.msra.mxu0 0.0
          %441 = vmatprep.subr.mxu0 0.0
          %442 = vmatpush1.msra.mxu0 0.0
          %443 = vmatprep.subr.mxu0 0.0
          %444 = vmatpush1.msra.mxu0 0.0
          %445 = vmatprep.subr.mxu0 0.0
          %446 = vmatpush1.msra.mxu0 0.0
          %447 = vmatprep.subr.mxu0 0.0
          %448 = vmatpush1.msra.mxu0 0.0
          %449 = vmatprep.subr.mxu0 0.0
          %450 = vmatpush1.msra.mxu0 0.0
          %451 = vmatprep.subr.mxu0 0.0
          %452 = vmatpush1.msra.mxu0 0.0
          %453 = vmatprep.subr.mxu0 0.0
          %454 = vmatpush1.msra.mxu0 0.0
          %455 = vmatprep.subr.mxu0 0.0
          %456 = vmatpush1.msra.mxu0 0.0
          %457 = vmatprep.subr.mxu0 0.0
          %458 = vmatpush1.msra.mxu0 0.0
          %459 = vmatprep.subr.mxu0 0.0
          %460 = vmatpush1.msra.mxu0 0.0
          %461 = vmatprep.subr.mxu0 0.0
          %462 = vmatpush1.msra.mxu0 0.0
          %463 = vmatprep.subr.mxu0 0.0
          %464 = vmatpush1.msra.mxu0 0.0
          %465 = vmatprep.subr.mxu0 0.0
          %466 = vmatpush1.msra.mxu0 0.0
          %467 = vmatprep.subr.mxu0 0.0
          %468 = vmatpush1.msra.mxu0 0.0
          %469 = vmatprep.subr.mxu0 0.0
          %470 = vmatpush1.msra.mxu0 0.0
          %471 = vmatprep.mubr.f32.mxu0 0.0
          %472 = vmatmul.mubr.f32.gmra.mrb[0].mxu0 %v389
          %v473 = vpop.f32.mrb[0].mxu0
          %v474 = vadd.f32 0.0, %v473
          %v475 = vpop.f32.mrb[0].mxu0
          %476 = vmatprep.mubr.f32.mxu0 0.0
          %477 = vmatmul.mubr.f32.gmra.mrb[0].mxu0 %v390
          %v478 = vpop.f32.mrb[0].mxu0
          %v479 = vadd.f32 0.0, %v478
          %v480 = vpop.f32.mrb[0].mxu0
          %481 = vdwg.mxu0
          %482 = vst [vmem:[#allocation2] sm:$0xff] %v474
          %483 = vst [vmem:[#allocation2 + $0x8] sm:$0xff] %v479
        $region56: #{representation_net_forward.1} parent=39 // pred_fallthru
          _
        %v484 = vld [vmem:[#allocation2] sm:$0xff]
        %v485 = vld [vmem:[#allocation2 + $0x8] sm:$0xff]
        %v486 = vadd.f32 %v484, %v485
        %v487 = vrot.slane %v486, 4
        %v488 = vadd.f32 %v486, %v487
        %v489 = vrot.slane %v488, 2
        %v490 = vadd.f32 %v488, %v489
        %v491 = vrot.slane %v490, 1
        %v492 = vadd.f32 %v490, %v491
        %v493 = vmul.f32 %v484, %v484
        %v494 = vmul.f32 %v485, %v485
        %v495 = vadd.f32 %v493, %v494
        %v496 = vrot.slane %v495, 4
        %v497 = vadd.f32 %v495, %v496
        %v498 = vrot.slane %v497, 2
        %v499 = vadd.f32 %v497, %v498
        %v500 = vrot.slane %v499, 1
        %v501 = vadd.f32 %v499, %v500
        %v502 = vmul.f32 %v492, 0.1
        %v503 = vmul.f32 %v501, 0.1
        %v504 = vmul.f32 %v502, %v502
        %v505 = vsub.f32 %v503, %v504
        %v506 = vadd.f32 %v505, 1e-05
        %v507 = vrsqrt.pop %v506
        %v508 = vld [vmem:[%s282] sm:$0x1]
        %v509 = vmul.f32 %v507, %v508
        %v510 = vld [vmem:[%s285] sm:$0x1]
        %v511 = vmul.f32 %v502, %v509
        %v512 = vsub.f32 %v510, %v511
        %v513 = vlaneseq
        %v514 = vshrl.u32 %v513, 7
        %v515 = vsub.s32 0, %v514
        %v516 = vrot.slane %v509, %v515
        %v517 = vmul.f32 %v484, %v516
        %v518 = vmul.f32 %v485, %v516
        %v520 = vlaneseq
        %v521 = vshrl.u32 %v520, 7
        %v522 = vsub.s32 0, %v521
        %v523 = vrot.slane %v512, %v522
        %v525 = vadd.f32 %v517, %v523
        %v526 = vadd.f32 %v518, %v523
        %vm527 = vcmp.gt.f32.partialorder %v525, 0.0
        %vm528 = vcmp.gt.f32.partialorder %v526, 0.0
        %v529 = vmin.f32 %v525, 0.0
        %v530 = vmin.f32 %v526, 0.0
        %v531 = vmul.f32 %v529, 1.442695
        %v532 = vpow.pop %v531
        %v533 = vmul.f32 %v530, 1.442695
        %v534 = vpow.pop %v533
        %v535 = vsub.f32 %v532, 1.0
        %v536 = vsub.f32 %v534, 1.0
        %v537 = vsel %vm527, %v525, %v535
        %v538 = vsel %vm528, %v526, %v536
        %v539 = vlaneseq
        %v540 = vshrl.u32 %v539, 7
        %v541 = vadd.s32 %v540, 8
        %vm542 = vcmp.lt.s32.totalorder %v540, 10
        %vm543 = vcmp.lt.s32.totalorder %v541, 10
        %v544 = vsel %vm542, 1, 0
        %v545 = vsel %vm543, 1, 0
        %v546 = vcvt.s32.f32 %v544
        %v547 = vcvt.s32.f32 %v545
        %v548 = vmul.f32 %v537, %v546
        %v549 = vmul.f32 %v538, %v547
        %550 = vst [vmem:[#allocation2] sm:$0xff] %v548
        %551 = vst [vmem:[#allocation2 + $0x8] sm:$0xff] %v549
        %p552 = scmp.eq.s32.totalorder %s21, 2
        // Predicated region
        $region57: #{representation_net_forward.1} parent=39 // pred_check
          %p553 = pneg %p552
        $region58: #{representation_net_forward.1} parent=39 // pred_check_branch
          %555 = sbr.rel (%p553) target = $region60
        $region59: #{representation_net_forward.1} parent=39 // pred_region
          %556 = vst [vmem:[#allocation8] sm:$0xff] %v548
          %557 = vst [vmem:[#allocation8 + $0x8] sm:$0xff] %v549
        $region60: #{representation_net_forward.1} parent=39 // pred_fallthru
          _
        // Predicated region
        $region61: #{representation_net_forward.1} parent=39 // pred_check
          %p558 = pneg %p160
        $region62: #{representation_net_forward.1} parent=39 // pred_check_branch
          %560 = sbr.rel (%p558) target = $region64
        $region63: #{representation_net_forward.1} parent=39 // pred_region
          %s562 = ssub.s32 256, 256
          %563 = vsyncadd [#allocation5], %s562
          %s564 = sshll.u32 [#allocation8], 4
          %s565 = int_to_ptr.vmem [resolvable:$true] %s564
          %570 = dma.vmem_to_hbm [thread:$0]  %s565, 256, %s5, [#allocation5], 128, 128, 8
        $region64: #{representation_net_forward.1} parent=39 // pred_fallthru
          _
        // Predicated region
        $region65: #{representation_net_forward.1} parent=39 // pred_check
          %p571 = pneg %p160
        $region66: #{representation_net_forward.1} parent=39 // pred_check_branch
          %573 = sbr.rel (%p571) target = $region68
        $region67: #{representation_net_forward.1} parent=39 // pred_region
          %574 = dma.done [#allocation5], 256
        $region68: #{representation_net_forward.1} parent=39 // pred_fallthru
          _
      $region40: #{representation_net_forward.1} parent=5 // pred_fallthru
        _
      %p575 = scmp.le.s32.totalorder 2, %s16
      // Predicated region
      $region69: #{representation_net_forward.1} parent=5 // pred_check
        %p576 = pneg %p575
      $region70: #{representation_net_forward.1} parent=5 // pred_check_branch
        %578 = sbr.rel (%p576) target = $region72
      $region71: #{representation_net_forward.1} parent=5 // pred_region
        %s579 = ssub.s32 %s16, 2
      $region72: #{representation_net_forward.1} parent=5 // pred_fallthru
        _
    $region6: #{representation_net_forward.1} parent=1 // loop_footer
      %s20 = sadd.s32 1, %s16
    $region7: #{representation_net_forward.1} parent=1 // loop_footer_branch
      %15 = sbr.rel target = $region3
    $region8: #{representation_net_forward.1} parent=1 // loop_exit
      _
    %580 = vsyncpa [#allocation4], 1
    %s581 = scalar_lea.sflag [#allocation4], 1
    %582 = vsyncpa %s581, 1
    %583 = vsyncpa [#allocation7], 1
    %s584 = scalar_lea.sflag [#allocation7], 1
    %585 = vsyncpa %s584, 1
    %586 = vsyncpa [#allocation5], 1
    %s587 = scalar_lea.sflag [#allocation5], 1
    %588 = vsyncpa %s587, 1

</llo_original>
